<compile_context>
chip_gen: v5e
topology: v5e:2x2
jax: 0.10.0
libtpu: 0.0.40
codegen_flags: <defaults>
</compile_context>

<pallas_src>
import functools

import jax
import jax.numpy as jnp
from jax.experimental import pallas as pl
from jax.experimental.pallas import tpu as pltpu


_SMALL_PAYLOAD_BYTES = 2 << 20     # below this, let XLA handle the transpose
_TARGET_BLOCK_BYTES = 4 << 20      # ~4 MiB of useful data per grid block
_MAX_BLOCK_BYTES = 8 << 20         # hard cap (also applied to user tiles)
_MIN_STRIDED_ROW_BYTES = 512       # min contiguous chunk for strided input DMA


def _round_up(x: int, m: int) -> int:
    return ((x + m - 1) // m) * m


def _round_down(x: int, m: int) -> int:
    return (x // m) * m


def _sublane_multiple(dtype) -> int:
    # Sublane packing: 8 rows for 4-byte, 16 for 2-byte, 32 for 1-byte dtypes.
    return max(8, 32 // jnp.dtype(dtype).itemsize)


def _largest_divisor_tile(T: int, align: int, upper: int):
    """Largest multiple of `align` that divides T and is <= upper (or None)."""
    if T % align != 0:
        return None
    units = T // align
    u = min(max(upper // align, 1), units)
    while u >= 1:
        if units % u == 0:
            return u * align
        u -= 1
    return None


def _pick_t_tile(T: int, row_bytes: int, align: int) -> int:
    """Sublane-aligned time tile: ~_TARGET_BLOCK_BYTES of useful data per
    block, and >= ~8 grid steps along T when T allows (pipeline overlap plus
    several blocks per v7x TensorCore)."""
    if T <= align:
        return T
    cap = max(align, _round_down(_TARGET_BLOCK_BYTES // max(row_bytes, 1), align))
    if T >= 8 * align:
        cap = min(cap, max(align, _round_down(T // 8, align)))
    cap = min(cap, max(align, _round_down(T, align)))
    d = _largest_divisor_tile(T, align, cap)
    if d is not None and d >= cap // 2:
        return d  # divisor tile close to the cap -> no masked tail block
    return cap


def _copy_kernel(x_ref, o_ref):
    # Pure copy: the (T, B) -> (B, T) permute lives entirely in the BlockSpec
    # index maps, so the body is just a DMA-fed load and a lane-dense store.
    o_ref[...] = x_ref[...]


def _relayout_kernel(x_ref, o_ref, *, batch: int, d: int):
    # x_ref: (t_tile, B*D) contiguous input slab; o_ref: (B, t_tile, D).
    # Static, lane-aligned slices (D % 128 == 0) stream straight into o_ref;
    # no monolithic swapaxes temp is materialized.
    for b in range(batch):
        o_ref[b] = x_ref[:, b * d:(b + 1) * d]


def _vmem_limit(pipeline_bytes: int) -> int:
    return int(min(48 << 20, max(32 << 20, 2 * pipeline_bytes)))


def _transpose01_blockspec_permute(x: jax.Array, t_tile: int) -> jax.Array:
    """Preferred path: grid over (B, T-tiles), pure-copy kernel."""
    T, B, D = x.shape
    itemsize = jnp.dtype(x.dtype).itemsize
    x2d = x.reshape(T, B * D)              # free bitcast of the contiguous input
    grid_t = pl.cdiv(T, t_tile)
    block_bytes = t_tile * D * itemsize
    pipeline_bytes = 4 * block_bytes       # (in + out), each double-buffered

    return pl.pallas_call(
        _copy_kernel,
        out_shape=jax.ShapeDtypeStruct((B, T, D), x.dtype),
        grid=(B, grid_t),
        in_specs=[
            # Block index b along the (B*D) axis selects elements [b*D, (b+1)*D):
            # row-strided DMA with D*itemsize-contiguous rows.
            pl.BlockSpec((t_tile, D), lambda b, i: (i, b)),
        ],
        # Squeezed batch dim -> kernel sees (t_tile, D); stores are lane-dense.
        out_specs=pl.BlockSpec((pl.Squeezed(), t_tile, D), lambda b, i: (b, i, 0)),
        compiler_params=pltpu.CompilerParams(
            dimension_semantics=("parallel", "parallel"),
            vmem_limit_bytes=_vmem_limit(pipeline_bytes),
        ),
        cost_estimate=pl.CostEstimate(
            flops=0, transcendentals=0,
            bytes_accessed=2 * T * B * D * itemsize),
    )(x2d)


def _transpose01_relayout(x: jax.Array, t_tile: int) -> jax.Array:
    """Fallback for D*itemsize < 512 B: contiguous input slabs + per-b copy."""
    T, B, D = x.shape
    itemsize = jnp.dtype(x.dtype).itemsize
    x2d = x.reshape(T, B * D)
    grid_t = pl.cdiv(T, t_tile)
    block_bytes = t_tile * B * D * itemsize
    pipeline_bytes = 4 * block_bytes

    kernel = functools.partial(_relayout_kernel, batch=B, d=D)
    return pl.pallas_call(
        kernel,
        out_shape=jax.ShapeDtypeStruct((B, T, D), x.dtype),
        grid=(grid_t,),
        in_specs=[pl.BlockSpec((t_tile, B * D), lambda i: (i, 0))],
        out_specs=pl.BlockSpec((B, t_tile, D), lambda i: (0, i, 0)),
        compiler_params=pltpu.CompilerParams(
            dimension_semantics=("parallel",),
            vmem_limit_bytes=_vmem_limit(pipeline_bytes),
        ),
        cost_estimate=pl.CostEstimate(
            flops=0, transcendentals=0,
            bytes_accessed=2 * T * B * D * itemsize),
    )(x2d)


def transpose01_pallas(x: jax.Array, *, t_tile=None) -> jax.Array:
    """(T, B, D) time-major -> (B, T, D) batch-major, streamed through VMEM."""
    if x.ndim != 3:
        # Hook payloads are (T, B, D); anything else falls back to XLA.
        return jnp.swapaxes(x, 0, 1)

    T, B, D = x.shape
    itemsize = jnp.dtype(x.dtype).itemsize
    total_bytes = T * B * D * itemsize
    if T == 0 or B == 0 or D == 0:
        return jnp.swapaxes(x, 0, 1)
    if D % 128 != 0 or total_bytes < _SMALL_PAYLOAD_BYTES:
        # Sub-128 lane output would force masked vst.msk stores, and tiny
        # payloads are dominated by launch/pipeline overhead; XLA can often
        # fold this transpose into the consumer's layout for free.
        return jnp.swapaxes(x, 0, 1)

    align = _sublane_multiple(x.dtype)
    # Strided input DMA keeps HBM efficiency only for >= 512 B rows.  For very
    # large B the fallback's static per-b loop would unroll badly, so take the
    # BlockSpec-permute path anyway.
    use_blockspec_permute = (D * itemsize >= _MIN_STRIDED_ROW_BYTES) or (B > 32)
    row_bytes = D * itemsize if use_blockspec_permute else B * D * itemsize

    if t_tile is None:
        t_tile = _pick_t_tile(T, row_bytes, align)
    else:
        # Validate user tile: sublane-aligned, <= T, and byte-capped so the
        # pipeline always fits v7x's 64 MiB VMEM.
        t_tile = max(align, _round_up(int(t_tile), align))
        if T >= align:
            t_tile = min(t_tile, max(align, _round_down(T, align)))
        max_t = max(align, _round_down(_MAX_BLOCK_BYTES // max(row_bytes, 1), align))
        t_tile = min(t_tile, max_t)
    t_tile = min(int(t_tile), T)

    if use_blockspec_permute:
        return _transpose01_blockspec_permute(x, t_tile)
    return _transpose01_relayout(x, t_tile)


class FeatureExtractor:
    """JAX/Pallas port of the fairseq FeatureExtractor hook."""

    def __init__(self, extract_input: bool = False):
        # Attribute name kept identical to the original module (extra_input).
        self.extra_input = extract_input
        self.features = None

    def __call__(self, module, args, output):
        if self.extra_input:
            x = args[0]
        else:
            if isinstance(output, tuple):
                output = output[0]
            x = output
        # .detach(): arrays are immutable in JAX; stop_gradient is the closest
        # semantic match.
        x = jax.lax.stop_gradient(x)
        self.features = transpose01_pallas(x)

    def get(self):
        features = self.features
        self.features = None
        return features


if __name__ == "__main__":
    key = jax.random.PRNGKey(0)
    k1, k2, k3 = jax.random.split(key, 3)

    # --- Case 1: hook semantics at a tiny shape (XLA fallback path) ---------
    T, B, D = 8, 2, 32  # time-major decoder activation (T, B, D)
    x = jax.random.normal(k1, (T, B, D), dtype=jnp.float32)
    hook = FeatureExtractor(extract_input=False)
    hook(module=None, args=(x,), output=(x, None))  # tuple gets unwrapped
    feats = jax.block_until_ready(hook.get())
    assert feats.shape == (B, T, D)
    assert bool(jnp.array_equal(feats, jnp.swapaxes(x, 0, 1)))
    assert hook.get() is None  # features are cleared after get()

    hook_in = FeatureExtractor(extract_input=True)
    hook_in(module=None, args=(x,), output=None)
    feats_in = jax.block_until_ready(hook_in.get())
    assert feats_in.shape == (B, T, D)
    assert bool(jnp.array_equal(feats_in, jnp.swapaxes(x, 0, 1)))

    # --- Case 2: f32 activation -> BlockSpec-permute pure-copy kernel -------
    T2, B2, D2 = 2048, 2, 512
    x2 = jax.random.normal(k2, (T2, B2, D2), dtype=jnp.float32)
    y2 = jax.block_until_ready(transpose01_pallas(x2))
    assert y2.shape == (B2, T2, D2)
    assert bool(jnp.array_equal(y2, jnp.swapaxes(x2, 0, 1)))

    # --- Case 3: bf16 D=128 (row < 512 B) -> per-batch relayout kernel ------
    T3, B3, D3 = 4096, 4, 128
    x3 = jax.random.normal(k3, (T3, B3, D3), dtype=jnp.float32).astype(jnp.bfloat16)
    y3 = jax.block_until_ready(transpose01_pallas(x3))
    assert y3.shape == (B3, T3, D3)
    assert bool(jnp.array_equal(y3, jnp.swapaxes(x3, 0, 1)))

    # --- Case 4: explicit unaligned, non-divisor tile (tail-block masking) --
    y4 = jax.block_until_ready(transpose01_pallas(x2, t_tile=100))
    assert bool(jnp.array_equal(y4, jnp.swapaxes(x2, 0, 1)))

    print("KERNEL_OK")
</pallas_src>

<mosaic_0001>
module attributes {stable_mosaic.version = 11 : i64} {
  func.func @_copy_kernel(%arg0: i32, %arg1: i32, %arg2: memref<256x512xf32, #tpu.memory_space<vmem>>, %arg3: memref<1x256x512xf32, #tpu.memory_space<vmem>>) attributes {dimension_semantics = [#tpu.dimension_semantics<parallel>, #tpu.dimension_semantics<parallel>], iteration_bounds = array<i64: 2, 8>, scalar_prefetch = 0 : i64, scratch_operands = 0 : i64, tpu.core_type = #tpu.core_type<tc>, window_params = [{transform_indices = @transform_0, window_bounds = array<i64: 256, 512>}, {transform_indices = @transform_1, window_bounds = array<i64: 1, 256, 512>}]} {
    %c0 = arith.constant 0 : index
    %c0_0 = arith.constant 0 : index
    %0 = vector.load %arg2[%c0, %c0_0] : memref<256x512xf32, #tpu.memory_space<vmem>>, vector<256x512xf32>
    %c0_1 = arith.constant 0 : index
    %c0_2 = arith.constant 0 : index
    %c0_3 = arith.constant 0 : index
    %1 = vector.load %arg3[%c0_1, %c0_2, %c0_3] : memref<1x256x512xf32, #tpu.memory_space<vmem>>, vector<1x256x512xf32>
    %2 = vector.shape_cast %1 : vector<1x256x512xf32> to vector<256x512xf32>
    %3 = vector.shape_cast %0 : vector<256x512xf32> to vector<1x256x512xf32>
    tpu.vector_store %arg3[%c0_1, %c0_2, %c0_3], %3 {strides = array<i32>} : memref<1x256x512xf32, #tpu.memory_space<vmem>>, vector<1x256x512xf32>,
    return
  }
  func.func @transform_0(%arg0: i32, %arg1: i32) -> (i32, i32) {
    %c0_i32 = arith.constant 0 : i32
    return %arg1, %arg0 : i32, i32
  }
  func.func @transform_1(%arg0: i32, %arg1: i32) -> (i32, i32, i32) {
    %c0_i32 = arith.constant 0 : i32
    %c0_i32_0 = arith.constant 0 : i32
    return %arg0, %arg1, %c0_i32 : i32, i32, i32
  }
}

</mosaic_0001>

<llo_original>
// kernel: tpu_custom_call.1
$region0: #{tpu_custom_call.1}
  #allocation0 [shape = 'u32[]', space=smem, size = 0x4, offset = 0x4, fixed_abs, tag = 'smem constant byte address 0x4 - core index']
  #allocation1 [shape = 'u32[72,128]{1,0:T(1,128)}', space=vmem, size = 0x9000, scoped, tag = 'internal scratch']
  %s0 = inlined_call_operand.hbm [shape: f32[2048,1024], index: 0, kind: input, shape index: {}]
  %s1 = inlined_call_operand.hbm [shape: f32[2,2048,512], index: 1, kind: output, shape index: {}]
  %s2 = sld [smem:[#allocation0]]
  $region41: #{tpu_custom_call.1} parent=0
    _
  %s4 = ssub.s32 1, %s2
  %s5 = scalar_select 0, %s4, %s2
  $region1: #{tpu_custom_call.1} parent=0
    #allocation2 [shape = 'u8[1048576]{0}', space=vmem, size = 0x100000, scoped, tag = 'input window, operand 0']
    #allocation3 [shape = 's32[2]{0}', space=sflag, size = 0x8, scoped, tag = 'scoped memory for tpu_custom_call.1']
    #allocation4 [shape = 's32[2]{0}', space=sflag, size = 0x8, scoped, tag = 'scoped memory for tpu_custom_call.1']
    #allocation5 [shape = 'u8[1048576]{0}', space=vmem, size = 0x100000, scoped, tag = 'output window, operand 0']
    %6 = vsyncpa [#allocation3], 0
    %s7 = scalar_lea.sflag [#allocation3], 1
    %8 = vsyncpa %s7, 0
    %9 = vsyncpa [#allocation4], 0
    %s10 = scalar_lea.sflag [#allocation4], 1
    %11 = vsyncpa %s10, 0
    loop: start=0, step=1, limit=18
    $region2: #{tpu_custom_call.1} parent=1 // loop_pre_header
      _
    $region3: #{tpu_custom_call.1} parent=1 // loop_header
      %s13 = sphi 0, %s17
      %p14 = scmp.ge.s32.totalorder %s13, 18
      %s20 = sphi 0, %s32
      %s21 = sphi 0, %s28
      %s22 = sphi 0, %s20
      %s23 = sphi 0, %s21
      %s24 = sphi 0, %s22
      %s25 = sphi 0, %s23
      %s37 = sphi 0, %s39
      %s40 = sphi 0, %s37
      %s41 = sphi 0, %s40
      %s57 = sphi 0, %s41
      %s65 = sphi 0, %s67
      %s68 = sphi 0, %s65
      %s69 = sphi 0, %s68
      %s85 = sphi 0, %s69
    $region4: #{tpu_custom_call.1} parent=1 // loop_header_branch
      %16 = sbr.rel (%p14) target = $region8
    $region5: #{tpu_custom_call.1} parent=1 // loop_body
      %s18 = ssub.s32 %s13, 1
      %s19 = ssub.s32 %s13, 2
      %s26 = sadd.s32 1, %s21
      %p27 = scmp.ge.s32.totalorder %s26, 8
      %s28 = scalar_select %p27, 0, %s26
      %s29 = sadd.s32 1, %s20
      %s30 = scalar_select %p27, %s29, %s20
      %p31 = scmp.ge.s32.totalorder %s30, 2
      %s32 = scalar_select %p31, 0, %s30
      %s33 = ssub.s32 %s21, %s28
      %s34 = ssub.s32 %s20, %s32
      %s35 = sor.u32 %s33, %s34
      %p36 = scmp.eq.s32.totalorder %s35, 0
      %s38 = sadd.s32 %s37, 1
      %s39 = scalar_select %p36, %s37, %s38
      %p42 = pneg %p36
      %p43 = scmp.eq.s32.totalorder %s13, 15
      %p44 = por %p42, %p43
      %p45 = scmp.ne.s32.totalorder %s37, %s40
      %p46 = scmp.eq.s32.totalorder %s13, 0
      %p47 = por %p45, %p46
      %p48 = scmp.ne.s32.totalorder %s37, %s40
      %p49 = scmp.eq.s32.totalorder %s18, 15
      %p50 = por %p48, %p49
      %p51 = scmp.ne.s32.totalorder %s40, %s41
      %p52 = scmp.eq.s32.totalorder %s18, 0
      %p53 = por %p51, %p52
      %p54 = scmp.ne.s32.totalorder %s40, %s41
      %p55 = scmp.eq.s32.totalorder %s19, 15
      %p56 = por %p54, %p55
      %p58 = scmp.ne.s32.totalorder %s41, %s57
      %p59 = scmp.eq.s32.totalorder %s19, 0
      %p60 = por %p58, %p59
      %s61 = ssub.s32 %s20, %s32
      %s62 = ssub.s32 %s21, %s28
      %s63 = sor.u32 %s61, %s62
      %p64 = scmp.eq.s32.totalorder %s63, 0
      %s66 = sadd.s32 %s65, 1
      %s67 = scalar_select %p64, %s65, %s66
      %p70 = pneg %p64
      %p71 = scmp.eq.s32.totalorder %s13, 15
      %p72 = por %p70, %p71
      %p73 = scmp.ne.s32.totalorder %s65, %s68
      %p74 = scmp.eq.s32.totalorder %s13, 0
      %p75 = por %p73, %p74
      %p76 = scmp.ne.s32.totalorder %s65, %s68
      %p77 = scmp.eq.s32.totalorder %s18, 15
      %p78 = por %p76, %p77
      %p79 = scmp.ne.s32.totalorder %s68, %s69
      %p80 = scmp.eq.s32.totalorder %s18, 0
      %p81 = por %p79, %p80
      %p82 = scmp.ne.s32.totalorder %s68, %s69
      %p83 = scmp.eq.s32.totalorder %s19, 15
      %p84 = por %p82, %p83
      %p86 = scmp.ne.s32.totalorder %s69, %s85
      %p87 = scmp.eq.s32.totalorder %s19, 0
      %p88 = por %p86, %p87
      %p89 = scmp.le.s32.totalorder 1, %s13
      %p90 = scmp.lt.s32.totalorder %s13, 17
      %p91 = pnand %p89, %p90
      %p92 = pneg %p91
      // Predicated region
      $region9: #{tpu_custom_call.1} parent=5 // pred_check
        _
      $region10: #{tpu_custom_call.1} parent=5 // pred_check_branch
        %94 = sbr.rel (%p91) target = $region12
      $region11: #{tpu_custom_call.1} parent=5 // pred_region
        %s95 = ssub.s32 %s13, 1
      $region12: #{tpu_custom_call.1} parent=5 // pred_fallthru
        _
      %p96 = scmp.lt.s32.totalorder %s13, 16
      // Predicated region
      $region13: #{tpu_custom_call.1} parent=5 // pred_check
        %p97 = pneg %p96
      $region14: #{tpu_custom_call.1} parent=5 // pred_check_branch
        %99 = sbr.rel (%p97) target = $region16
      $region15: #{tpu_custom_call.1} parent=5 // pred_region
        // Predicated region
        $region17: #{tpu_custom_call.1} parent=15 // pred_check
          %p100 = pneg %p47
        $region18: #{tpu_custom_call.1} parent=15 // pred_check_branch
          %102 = sbr.rel (%p100) target = $region20
        $region19: #{tpu_custom_call.1} parent=15 // pred_region
          %s103 = sand.u32 %s37, 1
          %s104 = scalar_lea.sflag [#allocation3], %s103
          %s105 = sand.u32 %s37, 1
          %s106 = smul.addr %s105, 1024
          %s107 = scalar_lea.vmem [#allocation2], %s106
          %s108 = smul.u32 32, %s21
          %s109 = smul.u32 4, %s20
          %111 = vsyncadd %s104, 0
          %s112 = smul.addr %s108, 8
          %s113 = sadd.s32 %s109, %s112
          %s114 = smul.addr %s113, 8
          %s115 = scalar_lea.hbm %s0, %s114
          %s116 = sshll.u32 %s115, 4
          %s117 = int_to_ptr.hbm [resolvable:$true] %s116
          %s118 = sshll.u32 %s107, 4
          %s119 = int_to_ptr.vmem [resolvable:$true] %s118
          %124 = dma.hbm_to_vmem [thread:$0]  %s117, 16384, %s119, %s104, 1024, 512, 32
        $region20: #{tpu_custom_call.1} parent=15 // pred_fallthru
          _
      $region16: #{tpu_custom_call.1} parent=5 // pred_fallthru
        _
      %p125 = scmp.le.s32.totalorder 1, %s13
      %p126 = scmp.lt.s32.totalorder %s13, 17
      %p127 = pnand %p125, %p126
      %p128 = pneg %p127
      // Predicated region
      $region21: #{tpu_custom_call.1} parent=5 // pred_check
        _
      $region22: #{tpu_custom_call.1} parent=5 // pred_check_branch
        %130 = sbr.rel (%p127) target = $region24
      $region23: #{tpu_custom_call.1} parent=5 // pred_region
        %s131 = ssub.s32 %s13, 1
        %s132 = sand.u32 %s40, 1
        %s133 = scalar_lea.sflag [#allocation3], %s132
        %s134 = sand.u32 %s40, 1
        %s135 = smul.addr %s134, 1024
        %s136 = scalar_lea.vmem [#allocation2], %s135
        // Predicated region
        $region25: #{tpu_custom_call.1} parent=23 // pred_check
          %p137 = pneg %p53
        $region26: #{tpu_custom_call.1} parent=23 // pred_check_branch
          %139 = sbr.rel (%p137) target = $region28
        $region27: #{tpu_custom_call.1} parent=23 // pred_region
          %141 = dma.done %s133, 16384
        $region28: #{tpu_custom_call.1} parent=23 // pred_fallthru
          _
        %s142 = sand.u32 %s40, 1
        %s143 = scalar_lea.sflag [#allocation3], %s142
        %s144 = sand.u32 %s40, 1
        %s145 = smul.addr %s144, 1024
        %s146 = scalar_lea.vmem [#allocation2], %s145
        %p147 = pneg %p53
        %p148 = pneg %p50
        %p149 = pneg %p81
        %p150 = pneg %p78
        %s151 = sand.u32 %s68, 1
        %s152 = scalar_lea.sflag [#allocation4], %s151
        %s153 = sand.u32 %s68, 1
        %s154 = smul.addr %s153, 1024
        %s155 = scalar_lea.vmem [#allocation5], %s154
        %s156 = smul.u32 32, %s23
        %s157 = smul.u32 4, %s22
        %s158 = smul.u32 32, %s23
        %v159 = vld [vmem:[%s136] sm:$0xff]
        %v160 = vld [vmem:[%s136 + $0x8] sm:$0xff]
        %v161 = vld [vmem:[%s136 + $0x10] sm:$0xff]
        %v162 = vld [vmem:[%s136 + $0x18] sm:$0xff]
        %v163 = vld [vmem:[%s136 + $0x20] sm:$0xff]
        %v164 = vld [vmem:[%s136 + $0x28] sm:$0xff]
        %v165 = vld [vmem:[%s136 + $0x30] sm:$0xff]
        %v166 = vld [vmem:[%s136 + $0x38] sm:$0xff]
        %v167 = vld [vmem:[%s136 + $0x40] sm:$0xff]
        %v168 = vld [vmem:[%s136 + $0x48] sm:$0xff]
        %v169 = vld [vmem:[%s136 + $0x50] sm:$0xff]
        %v170 = vld [vmem:[%s136 + $0x58] sm:$0xff]
        %v171 = vld [vmem:[%s136 + $0x60] sm:$0xff]
        %v172 = vld [vmem:[%s136 + $0x68] sm:$0xff]
        %v173 = vld [vmem:[%s136 + $0x70] sm:$0xff]
        %v174 = vld [vmem:[%s136 + $0x78] sm:$0xff]
        %v175 = vld [vmem:[%s136 + $0x80] sm:$0xff]
        %v176 = vld [vmem:[%s136 + $0x88] sm:$0xff]
        %v177 = vld [vmem:[%s136 + $0x90] sm:$0xff]
        %v178 = vld [vmem:[%s136 + $0x98] sm:$0xff]
        %v179 = vld [vmem:[%s136 + $0xa0] sm:$0xff]
        %v180 = vld [vmem:[%s136 + $0xa8] sm:$0xff]
        %v181 = vld [vmem:[%s136 + $0xb0] sm:$0xff]
        %v182 = vld [vmem:[%s136 + $0xb8] sm:$0xff]
        %v183 = vld [vmem:[%s136 + $0xc0] sm:$0xff]
        %v184 = vld [vmem:[%s136 + $0xc8] sm:$0xff]
        %v185 = vld [vmem:[%s136 + $0xd0] sm:$0xff]
        %v186 = vld [vmem:[%s136 + $0xd8] sm:$0xff]
        %v187 = vld [vmem:[%s136 + $0xe0] sm:$0xff]
        %v188 = vld [vmem:[%s136 + $0xe8] sm:$0xff]
        %v189 = vld [vmem:[%s136 + $0xf0] sm:$0xff]
        %v190 = vld [vmem:[%s136 + $0xf8] sm:$0xff]
        %v191 = vld [vmem:[%s136 + $0x100] sm:$0xff]
        %v192 = vld [vmem:[%s136 + $0x108] sm:$0xff]
        %v193 = vld [vmem:[%s136 + $0x110] sm:$0xff]
        %v194 = vld [vmem:[%s136 + $0x118] sm:$0xff]
        %v195 = vld [vmem:[%s136 + $0x120] sm:$0xff]
        %v196 = vld [vmem:[%s136 + $0x128] sm:$0xff]
        %v197 = vld [vmem:[%s136 + $0x130] sm:$0xff]
        %v198 = vld [vmem:[%s136 + $0x138] sm:$0xff]
        %v199 = vld [vmem:[%s136 + $0x140] sm:$0xff]
        %v200 = vld [vmem:[%s136 + $0x148] sm:$0xff]
        %v201 = vld [vmem:[%s136 + $0x150] sm:$0xff]
        %v202 = vld [vmem:[%s136 + $0x158] sm:$0xff]
        %v203 = vld [vmem:[%s136 + $0x160] sm:$0xff]
        %v204 = vld [vmem:[%s136 + $0x168] sm:$0xff]
        %v205 = vld [vmem:[%s136 + $0x170] sm:$0xff]
        %v206 = vld [vmem:[%s136 + $0x178] sm:$0xff]
        %v207 = vld [vmem:[%s136 + $0x180] sm:$0xff]
        %v208 = vld [vmem:[%s136 + $0x188] sm:$0xff]
        %v209 = vld [vmem:[%s136 + $0x190] sm:$0xff]
        %v210 = vld [vmem:[%s136 + $0x198] sm:$0xff]
        %v211 = vld [vmem:[%s136 + $0x1a0] sm:$0xff]
        %v212 = vld [vmem:[%s136 + $0x1a8] sm:$0xff]
        %v213 = vld [vmem:[%s136 + $0x1b0] sm:$0xff]
        %v214 = vld [vmem:[%s136 + $0x1b8] sm:$0xff]
        %v215 = vld [vmem:[%s136 + $0x1c0] sm:$0xff]
        %v216 = vld [vmem:[%s136 + $0x1c8] sm:$0xff]
        %v217 = vld [vmem:[%s136 + $0x1d0] sm:$0xff]
        %v218 = vld [vmem:[%s136 + $0x1d8] sm:$0xff]
        %v219 = vld [vmem:[%s136 + $0x1e0] sm:$0xff]
        %v220 = vld [vmem:[%s136 + $0x1e8] sm:$0xff]
        %v221 = vld [vmem:[%s136 + $0x1f0] sm:$0xff]
        %v222 = vld [vmem:[%s136 + $0x1f8] sm:$0xff]
        %v223 = vld [vmem:[%s136 + $0x200] sm:$0xff]
        %v224 = vld [vmem:[%s136 + $0x208] sm:$0xff]
        %v225 = vld [vmem:[%s136 + $0x210] sm:$0xff]
        %v226 = vld [vmem:[%s136 + $0x218] sm:$0xff]
        %v227 = vld [vmem:[%s136 + $0x220] sm:$0xff]
        %v228 = vld [vmem:[%s136 + $0x228] sm:$0xff]
        %v229 = vld [vmem:[%s136 + $0x230] sm:$0xff]
        %v230 = vld [vmem:[%s136 + $0x238] sm:$0xff]
        %v231 = vld [vmem:[%s136 + $0x240] sm:$0xff]
        %v232 = vld [vmem:[%s136 + $0x248] sm:$0xff]
        %v233 = vld [vmem:[%s136 + $0x250] sm:$0xff]
        %v234 = vld [vmem:[%s136 + $0x258] sm:$0xff]
        %v235 = vld [vmem:[%s136 + $0x260] sm:$0xff]
        %v236 = vld [vmem:[%s136 + $0x268] sm:$0xff]
        %v237 = vld [vmem:[%s136 + $0x270] sm:$0xff]
        %v238 = vld [vmem:[%s136 + $0x278] sm:$0xff]
        %v239 = vld [vmem:[%s136 + $0x280] sm:$0xff]
        %v240 = vld [vmem:[%s136 + $0x288] sm:$0xff]
        %v241 = vld [vmem:[%s136 + $0x290] sm:$0xff]
        %v242 = vld [vmem:[%s136 + $0x298] sm:$0xff]
        %v243 = vld [vmem:[%s136 + $0x2a0] sm:$0xff]
        %v244 = vld [vmem:[%s136 + $0x2a8] sm:$0xff]
        %v245 = vld [vmem:[%s136 + $0x2b0] sm:$0xff]
        %v246 = vld [vmem:[%s136 + $0x2b8] sm:$0xff]
        %v247 = vld [vmem:[%s136 + $0x2c0] sm:$0xff]
        %v248 = vld [vmem:[%s136 + $0x2c8] sm:$0xff]
        %v249 = vld [vmem:[%s136 + $0x2d0] sm:$0xff]
        %v250 = vld [vmem:[%s136 + $0x2d8] sm:$0xff]
        %v251 = vld [vmem:[%s136 + $0x2e0] sm:$0xff]
        %v252 = vld [vmem:[%s136 + $0x2e8] sm:$0xff]
        %v253 = vld [vmem:[%s136 + $0x2f0] sm:$0xff]
        %v254 = vld [vmem:[%s136 + $0x2f8] sm:$0xff]
        %v255 = vld [vmem:[%s136 + $0x300] sm:$0xff]
        %v256 = vld [vmem:[%s136 + $0x308] sm:$0xff]
        %v257 = vld [vmem:[%s136 + $0x310] sm:$0xff]
        %v258 = vld [vmem:[%s136 + $0x318] sm:$0xff]
        %v259 = vld [vmem:[%s136 + $0x320] sm:$0xff]
        %v260 = vld [vmem:[%s136 + $0x328] sm:$0xff]
        %v261 = vld [vmem:[%s136 + $0x330] sm:$0xff]
        %v262 = vld [vmem:[%s136 + $0x338] sm:$0xff]
        %v263 = vld [vmem:[%s136 + $0x340] sm:$0xff]
        %v264 = vld [vmem:[%s136 + $0x348] sm:$0xff]
        %v265 = vld [vmem:[%s136 + $0x350] sm:$0xff]
        %v266 = vld [vmem:[%s136 + $0x358] sm:$0xff]
        %v267 = vld [vmem:[%s136 + $0x360] sm:$0xff]
        %v268 = vld [vmem:[%s136 + $0x368] sm:$0xff]
        %v269 = vld [vmem:[%s136 + $0x370] sm:$0xff]
        %v270 = vld [vmem:[%s136 + $0x378] sm:$0xff]
        %v271 = vld [vmem:[%s136 + $0x380] sm:$0xff]
        %v272 = vld [vmem:[%s136 + $0x388] sm:$0xff]
        %v273 = vld [vmem:[%s136 + $0x390] sm:$0xff]
        %v274 = vld [vmem:[%s136 + $0x398] sm:$0xff]
        %v275 = vld [vmem:[%s136 + $0x3a0] sm:$0xff]
        %v276 = vld [vmem:[%s136 + $0x3a8] sm:$0xff]
        %v277 = vld [vmem:[%s136 + $0x3b0] sm:$0xff]
        %v278 = vld [vmem:[%s136 + $0x3b8] sm:$0xff]
        %v279 = vld [vmem:[%s136 + $0x3c0] sm:$0xff]
        %v280 = vld [vmem:[%s136 + $0x3c8] sm:$0xff]
        %v281 = vld [vmem:[%s136 + $0x3d0] sm:$0xff]
        %v282 = vld [vmem:[%s136 + $0x3d8] sm:$0xff]
        %v283 = vld [vmem:[%s136 + $0x3e0] sm:$0xff]
        %v284 = vld [vmem:[%s136 + $0x3e8] sm:$0xff]
        %v285 = vld [vmem:[%s136 + $0x3f0] sm:$0xff]
        %v286 = vld [vmem:[%s136 + $0x3f8] sm:$0xff]
        %287 = vst [vmem:[%s155] sm:$0xff] %v159
        %288 = vst [vmem:[%s155 + $0x8] sm:$0xff] %v160
        %289 = vst [vmem:[%s155 + $0x10] sm:$0xff] %v161
        %290 = vst [vmem:[%s155 + $0x18] sm:$0xff] %v162
        %291 = vst [vmem:[%s155 + $0x20] sm:$0xff] %v163
        %292 = vst [vmem:[%s155 + $0x28] sm:$0xff] %v164
        %293 = vst [vmem:[%s155 + $0x30] sm:$0xff] %v165
        %294 = vst [vmem:[%s155 + $0x38] sm:$0xff] %v166
        %295 = vst [vmem:[%s155 + $0x40] sm:$0xff] %v167
        %296 = vst [vmem:[%s155 + $0x48] sm:$0xff] %v168
        %297 = vst [vmem:[%s155 + $0x50] sm:$0xff] %v169
        %298 = vst [vmem:[%s155 + $0x58] sm:$0xff] %v170
        %299 = vst [vmem:[%s155 + $0x60] sm:$0xff] %v171
        %300 = vst [vmem:[%s155 + $0x68] sm:$0xff] %v172
        %301 = vst [vmem:[%s155 + $0x70] sm:$0xff] %v173
        %302 = vst [vmem:[%s155 + $0x78] sm:$0xff] %v174
        %303 = vst [vmem:[%s155 + $0x80] sm:$0xff] %v175
        %304 = vst [vmem:[%s155 + $0x88] sm:$0xff] %v176
        %305 = vst [vmem:[%s155 + $0x90] sm:$0xff] %v177
        %306 = vst [vmem:[%s155 + $0x98] sm:$0xff] %v178
        %307 = vst [vmem:[%s155 + $0xa0] sm:$0xff] %v179
        %308 = vst [vmem:[%s155 + $0xa8] sm:$0xff] %v180
        %309 = vst [vmem:[%s155 + $0xb0] sm:$0xff] %v181
        %310 = vst [vmem:[%s155 + $0xb8] sm:$0xff] %v182
        %311 = vst [vmem:[%s155 + $0xc0] sm:$0xff] %v183
        %312 = vst [vmem:[%s155 + $0xc8] sm:$0xff] %v184
        %313 = vst [vmem:[%s155 + $0xd0] sm:$0xff] %v185
        %314 = vst [vmem:[%s155 + $0xd8] sm:$0xff] %v186
        %315 = vst [vmem:[%s155 + $0xe0] sm:$0xff] %v187
        %316 = vst [vmem:[%s155 + $0xe8] sm:$0xff] %v188
        %317 = vst [vmem:[%s155 + $0xf0] sm:$0xff] %v189
        %318 = vst [vmem:[%s155 + $0xf8] sm:$0xff] %v190
        %319 = vst [vmem:[%s155 + $0x100] sm:$0xff] %v191
        %320 = vst [vmem:[%s155 + $0x108] sm:$0xff] %v192
        %321 = vst [vmem:[%s155 + $0x110] sm:$0xff] %v193
        %322 = vst [vmem:[%s155 + $0x118] sm:$0xff] %v194
        %323 = vst [vmem:[%s155 + $0x120] sm:$0xff] %v195
        %324 = vst [vmem:[%s155 + $0x128] sm:$0xff] %v196
        %325 = vst [vmem:[%s155 + $0x130] sm:$0xff] %v197
        %326 = vst [vmem:[%s155 + $0x138] sm:$0xff] %v198
        %327 = vst [vmem:[%s155 + $0x140] sm:$0xff] %v199
        %328 = vst [vmem:[%s155 + $0x148] sm:$0xff] %v200
        %329 = vst [vmem:[%s155 + $0x150] sm:$0xff] %v201
        %330 = vst [vmem:[%s155 + $0x158] sm:$0xff] %v202
        %331 = vst [vmem:[%s155 + $0x160] sm:$0xff] %v203
        %332 = vst [vmem:[%s155 + $0x168] sm:$0xff] %v204
        %333 = vst [vmem:[%s155 + $0x170] sm:$0xff] %v205
        %334 = vst [vmem:[%s155 + $0x178] sm:$0xff] %v206
        %335 = vst [vmem:[%s155 + $0x180] sm:$0xff] %v207
        %336 = vst [vmem:[%s155 + $0x188] sm:$0xff] %v208
        %337 = vst [vmem:[%s155 + $0x190] sm:$0xff] %v209
        %338 = vst [vmem:[%s155 + $0x198] sm:$0xff] %v210
        %339 = vst [vmem:[%s155 + $0x1a0] sm:$0xff] %v211
        %340 = vst [vmem:[%s155 + $0x1a8] sm:$0xff] %v212
        %341 = vst [vmem:[%s155 + $0x1b0] sm:$0xff] %v213
        %342 = vst [vmem:[%s155 + $0x1b8] sm:$0xff] %v214
        %343 = vst [vmem:[%s155 + $0x1c0] sm:$0xff] %v215
        %344 = vst [vmem:[%s155 + $0x1c8] sm:$0xff] %v216
        %345 = vst [vmem:[%s155 + $0x1d0] sm:$0xff] %v217
        %346 = vst [vmem:[%s155 + $0x1d8] sm:$0xff] %v218
        %347 = vst [vmem:[%s155 + $0x1e0] sm:$0xff] %v219
        %348 = vst [vmem:[%s155 + $0x1e8] sm:$0xff] %v220
        %349 = vst [vmem:[%s155 + $0x1f0] sm:$0xff] %v221
        %350 = vst [vmem:[%s155 + $0x1f8] sm:$0xff] %v222
        %351 = vst [vmem:[%s155 + $0x200] sm:$0xff] %v223
        %352 = vst [vmem:[%s155 + $0x208] sm:$0xff] %v224
        %353 = vst [vmem:[%s155 + $0x210] sm:$0xff] %v225
        %354 = vst [vmem:[%s155 + $0x218] sm:$0xff] %v226
        %355 = vst [vmem:[%s155 + $0x220] sm:$0xff] %v227
        %356 = vst [vmem:[%s155 + $0x228] sm:$0xff] %v228
        %357 = vst [vmem:[%s155 + $0x230] sm:$0xff] %v229
        %358 = vst [vmem:[%s155 + $0x238] sm:$0xff] %v230
        %359 = vst [vmem:[%s155 + $0x240] sm:$0xff] %v231
        %360 = vst [vmem:[%s155 + $0x248] sm:$0xff] %v232
        %361 = vst [vmem:[%s155 + $0x250] sm:$0xff] %v233
        %362 = vst [vmem:[%s155 + $0x258] sm:$0xff] %v234
        %363 = vst [vmem:[%s155 + $0x260] sm:$0xff] %v235
        %364 = vst [vmem:[%s155 + $0x268] sm:$0xff] %v236
        %365 = vst [vmem:[%s155 + $0x270] sm:$0xff] %v237
        %366 = vst [vmem:[%s155 + $0x278] sm:$0xff] %v238
        %367 = vst [vmem:[%s155 + $0x280] sm:$0xff] %v239
        %368 = vst [vmem:[%s155 + $0x288] sm:$0xff] %v240
        %369 = vst [vmem:[%s155 + $0x290] sm:$0xff] %v241
        %370 = vst [vmem:[%s155 + $0x298] sm:$0xff] %v242
        %371 = vst [vmem:[%s155 + $0x2a0] sm:$0xff] %v243
        %372 = vst [vmem:[%s155 + $0x2a8] sm:$0xff] %v244
        %373 = vst [vmem:[%s155 + $0x2b0] sm:$0xff] %v245
        %374 = vst [vmem:[%s155 + $0x2b8] sm:$0xff] %v246
        %375 = vst [vmem:[%s155 + $0x2c0] sm:$0xff] %v247
        %376 = vst [vmem:[%s155 + $0x2c8] sm:$0xff] %v248
        %377 = vst [vmem:[%s155 + $0x2d0] sm:$0xff] %v249
        %378 = vst [vmem:[%s155 + $0x2d8] sm:$0xff] %v250
        %379 = vst [vmem:[%s155 + $0x2e0] sm:$0xff] %v251
        %380 = vst [vmem:[%s155 + $0x2e8] sm:$0xff] %v252
        %381 = vst [vmem:[%s155 + $0x2f0] sm:$0xff] %v253
        %382 = vst [vmem:[%s155 + $0x2f8] sm:$0xff] %v254
        %383 = vst [vmem:[%s155 + $0x300] sm:$0xff] %v255
        %384 = vst [vmem:[%s155 + $0x308] sm:$0xff] %v256
        %385 = vst [vmem:[%s155 + $0x310] sm:$0xff] %v257
        %386 = vst [vmem:[%s155 + $0x318] sm:$0xff] %v258
        %387 = vst [vmem:[%s155 + $0x320] sm:$0xff] %v259
        %388 = vst [vmem:[%s155 + $0x328] sm:$0xff] %v260
        %389 = vst [vmem:[%s155 + $0x330] sm:$0xff] %v261
        %390 = vst [vmem:[%s155 + $0x338] sm:$0xff] %v262
        %391 = vst [vmem:[%s155 + $0x340] sm:$0xff] %v263
        %392 = vst [vmem:[%s155 + $0x348] sm:$0xff] %v264
        %393 = vst [vmem:[%s155 + $0x350] sm:$0xff] %v265
        %394 = vst [vmem:[%s155 + $0x358] sm:$0xff] %v266
        %395 = vst [vmem:[%s155 + $0x360] sm:$0xff] %v267
        %396 = vst [vmem:[%s155 + $0x368] sm:$0xff] %v268
        %397 = vst [vmem:[%s155 + $0x370] sm:$0xff] %v269
        %398 = vst [vmem:[%s155 + $0x378] sm:$0xff] %v270
        %399 = vst [vmem:[%s155 + $0x380] sm:$0xff] %v271
        %400 = vst [vmem:[%s155 + $0x388] sm:$0xff] %v272
        %401 = vst [vmem:[%s155 + $0x390] sm:$0xff] %v273
        %402 = vst [vmem:[%s155 + $0x398] sm:$0xff] %v274
        %403 = vst [vmem:[%s155 + $0x3a0] sm:$0xff] %v275
        %404 = vst [vmem:[%s155 + $0x3a8] sm:$0xff] %v276
        %405 = vst [vmem:[%s155 + $0x3b0] sm:$0xff] %v277
        %406 = vst [vmem:[%s155 + $0x3b8] sm:$0xff] %v278
        %407 = vst [vmem:[%s155 + $0x3c0] sm:$0xff] %v279
        %408 = vst [vmem:[%s155 + $0x3c8] sm:$0xff] %v280
        %409 = vst [vmem:[%s155 + $0x3d0] sm:$0xff] %v281
        %410 = vst [vmem:[%s155 + $0x3d8] sm:$0xff] %v282
        %411 = vst [vmem:[%s155 + $0x3e0] sm:$0xff] %v283
        %412 = vst [vmem:[%s155 + $0x3e8] sm:$0xff] %v284
        %413 = vst [vmem:[%s155 + $0x3f0] sm:$0xff] %v285
        %414 = vst [vmem:[%s155 + $0x3f8] sm:$0xff] %v286
        %s415 = sand.u32 %s68, 1
        %s416 = scalar_lea.sflag [#allocation4], %s415
        %s417 = sand.u32 %s68, 1
        %s418 = smul.addr %s417, 1024
        %s419 = scalar_lea.vmem [#allocation5], %s418
        // Predicated region
        $region29: #{tpu_custom_call.1} parent=23 // pred_check
          %p420 = pneg %p78
        $region30: #{tpu_custom_call.1} parent=23 // pred_check_branch
          %422 = sbr.rel (%p420) target = $region32
        $region31: #{tpu_custom_call.1} parent=23 // pred_region
          %s423 = smul.u32 32, %s23
          %425 = vsyncadd %s416, 0
          %s426 = smul.addr %s423, 4
          %s427 = smul.addr %s22, 1024
          %s428 = sadd.s32 %s426, %s427
          %s429 = smul.addr %s428, 8
          %s430 = scalar_lea.hbm %s1, %s429
          %s431 = sshll.u32 %s419, 4
          %s432 = int_to_ptr.vmem [resolvable:$true] %s431
          %s433 = sshll.u32 %s430, 4
          %s434 = int_to_ptr.hbm [resolvable:$true] %s433
          %439 = dma.vmem_to_hbm [thread:$0]  %s432, 16384, %s434, %s416, 512, 512, 32
        $region32: #{tpu_custom_call.1} parent=23 // pred_fallthru
          _
      $region24: #{tpu_custom_call.1} parent=5 // pred_fallthru
        _
      %p440 = scmp.le.s32.totalorder 2, %s13
      // Predicated region
      $region33: #{tpu_custom_call.1} parent=5 // pred_check
        %p441 = pneg %p440
      $region34: #{tpu_custom_call.1} parent=5 // pred_check_branch
        %443 = sbr.rel (%p441) target = $region36
      $region35: #{tpu_custom_call.1} parent=5 // pred_region
        %s444 = ssub.s32 %s13, 2
        // Predicated region
        $region37: #{tpu_custom_call.1} parent=35 // pred_check
          %p445 = pneg %p84
        $region38: #{tpu_custom_call.1} parent=35 // pred_check_branch
          %447 = sbr.rel (%p445) target = $region40
        $region39: #{tpu_custom_call.1} parent=35 // pred_region
          %s448 = sand.u32 %s69, 1
          %s449 = scalar_lea.sflag [#allocation4], %s448
          %s450 = sand.u32 %s69, 1
          %s451 = smul.addr %s450, 1024
          %s452 = scalar_lea.vmem [#allocation5], %s451
          %454 = dma.done %s449, 16384
        $region40: #{tpu_custom_call.1} parent=35 // pred_fallthru
          _
      $region36: #{tpu_custom_call.1} parent=5 // pred_fallthru
        _
    $region6: #{tpu_custom_call.1} parent=1 // loop_footer
      %s17 = sadd.s32 1, %s13
    $region7: #{tpu_custom_call.1} parent=1 // loop_footer_branch
      %12 = sbr.rel target = $region3
    $region8: #{tpu_custom_call.1} parent=1 // loop_exit
      _
    %455 = vsyncpa [#allocation3], 1
    %s456 = scalar_lea.sflag [#allocation3], 1
    %457 = vsyncpa %s456, 1
    %458 = vsyncpa [#allocation4], 1
    %s459 = scalar_lea.sflag [#allocation4], 1
    %460 = vsyncpa %s459, 1

</llo_original>
